<compile_context>
chip_gen: v7x
topology: tpu7x:2x2x1
jax: 0.10.0
libtpu: 0.0.40
codegen_flags: <defaults>
</compile_context>

<pallas_src>
import functools

import jax
import jax.numpy as jnp
from jax.experimental import pallas as pl
from jax.experimental.pallas import tpu as pltpu


N_FEATURES = 16       # stands in for len(features) from the CSV
H1, H2, H3 = 128, 256, 128
H4 = 64               # true fc4 width
H4_PAD = 128          # zero-padded fc4 width (exact math, full MXU tile)
H5 = 1                # true fc5 output width
W5T_ROWS = 8          # fc5 weight stored transposed, padded to 8 sublanes
BN_EPS = 1e-5
BM_CAP = 2048         # max batch rows per grid step


# --------------------------------------------------------------------------- #
# Kernel
# --------------------------------------------------------------------------- #
def energy_predictor_kernel(
    x_ref,
    w1_ref, b1_ref,
    w2_ref, b2_ref,
    w3_ref, b3_ref,
    w4_ref, b4_ref,
    w5t_ref, b5_ref,
    o_ref,
):
    # fc1 (+ folded bn1) -> relu.  K = n_features is tiny; keep it f32.
    h = jnp.dot(x_ref[...], w1_ref[...], preferred_element_type=jnp.float32)
    h = jnp.maximum(h + b1_ref[...], 0.0)

    # fc2 (+ folded bn2) -> relu -> dropout (identity in eval)
    h = jnp.dot(h.astype(jnp.bfloat16), w2_ref[...],
                preferred_element_type=jnp.float32)
    h = jnp.maximum(h + b2_ref[...], 0.0)

    # fc3 (+ folded bn3) -> relu
    h = jnp.dot(h.astype(jnp.bfloat16), w3_ref[...],
                preferred_element_type=jnp.float32)
    h = jnp.maximum(h + b3_ref[...], 0.0)

    # fc4 -> relu -> dropout (identity in eval); width zero-padded 64 -> 128
    h = jnp.dot(h.astype(jnp.bfloat16), w4_ref[...],
                preferred_element_type=jnp.float32)
    h = jnp.maximum(h + b4_ref[...], 0.0)

    # fc5 in transposed form: y8[m, n] = sum_k w5t[m, k] * h[n, k]
    # (rhs contracted on its last dim, like q @ k.T in attention).  Row 0 of
    # w5t holds the real fc5 weights; rows 1..7 are zero padding.  The tile's
    # output is a single lane-dense (1, bm) f32 row.
    y8 = jax.lax.dot_general(
        w5t_ref[...], h.astype(jnp.bfloat16),
        dimension_numbers=(((1,), (1,)), ((), ())),
        preferred_element_type=jnp.float32)                  # (8, bm)
    o_ref[0] = y8[0:1, :] + b5_ref[0, 0]


# --------------------------------------------------------------------------- #
# Wrapper
# --------------------------------------------------------------------------- #
def _round_up(n, m):
    return -(-n // m) * m


def _cdiv(a, b):
    return -(-a // b)


@functools.partial(jax.jit, static_argnames=("bm",))
def energy_predictor(x, kparams, *, bm=None):
    """x: (B, N_FEATURES) float32. Returns (B, 1) float32."""
    B, F = x.shape
    (w1, b1, w2, b2, w3, b3, w4, b4, w5t, b5) = kparams

    if bm is None:
        # bm must be a multiple of 128 (lane-dense (1, bm) output row; also a
        # multiple of 16 for bf16 sublane packing).  Aim for >=2 grid steps so
        # the "parallel" batch axis can shard across both v7x TensorCores, but
        # cap at BM_CAP rows so per-step overhead stays negligible and VMEM
        # use stays ~6 MB.
        bm = min(BM_CAP, max(128, _round_up(_cdiv(B, 2), 128)))
    assert bm % 128 == 0

    Bp = _round_up(B, bm)
    xp = x if Bp == B else jnp.pad(x, ((0, Bp - B), (0, 0)))
    grid = Bp // bm

    def full_spec(shape):
        # whole (small) weight / bias resident in VMEM for every batch tile
        return pl.BlockSpec(shape, lambda i: (0,) * len(shape))

    in_specs = [
        pl.BlockSpec((bm, F), lambda i: (i, 0)),          # x tile (f32)
        full_spec(w1.shape), full_spec(b1.shape),
        full_spec(w2.shape), full_spec(b2.shape),
        full_spec(w3.shape), full_spec(b3.shape),
        full_spec(w4.shape), full_spec(b4.shape),
        full_spec(w5t.shape),
        pl.BlockSpec(memory_space=pltpu.MemorySpace.SMEM),  # b5 scalar
    ]
    # Packed output: one lane-dense (1, bm) f32 row per grid step.
    out_spec = pl.BlockSpec((1, 1, bm), lambda i: (i, 0, 0))

    flops = 2 * Bp * (F * H1 + H1 * H2 + H2 * H3 + H3 * H4_PAD
                      + H4_PAD * W5T_ROWS)
    param_bytes = (w1.size * 4 + b1.size * 4 + w2.size * 2 + b2.size * 4
                   + w3.size * 2 + b3.size * 4 + w4.size * 2 + b4.size * 4
                   + w5t.size * 2 + b5.size * 4)
    bytes_accessed = param_bytes + Bp * F * 4 + Bp * 4

    out = pl.pallas_call(
        energy_predictor_kernel,
        out_shape=jax.ShapeDtypeStruct((grid, 1, bm), jnp.float32),
        grid_spec=pltpu.PrefetchScalarGridSpec(
            num_scalar_prefetch=0,
            grid=(grid,),
            in_specs=in_specs,
            out_specs=out_spec,
        ),
        compiler_params=pltpu.CompilerParams(
            dimension_semantics=("parallel",),
            vmem_limit_bytes=32 * 1024 * 1024,
        ),
        cost_estimate=pl.CostEstimate(
            flops=flops, transcendentals=0, bytes_accessed=bytes_accessed),
    )(xp, w1, b1, w2, b2, w3, b3, w4, b4, w5t, b5)

    return out.reshape(Bp, 1)[:B]


# --------------------------------------------------------------------------- #
# Parameters: PyTorch-like raw params, then BN-folded / padded kernel params
# --------------------------------------------------------------------------- #
def init_raw_params(key):
    """Deterministic synthetic parameters (shapes from EnergyPredictor.__init__)."""
    ks = jax.random.split(key, 24)

    def linear(kw, kb, fan_in, fan_out):
        bound = 1.0 / jnp.sqrt(fan_in)
        w = jax.random.uniform(kw, (fan_in, fan_out), jnp.float32, -bound, bound)
        b = jax.random.uniform(kb, (1, fan_out), jnp.float32, -bound, bound)
        return w, b

    def bn(kg, kb, km, kv, dim):
        gamma = 1.0 + 0.1 * jax.random.normal(kg, (1, dim), jnp.float32)
        beta = 0.1 * jax.random.normal(kb, (1, dim), jnp.float32)
        mean = 0.1 * jax.random.normal(km, (1, dim), jnp.float32)
        var = jnp.abs(1.0 + 0.1 * jax.random.normal(kv, (1, dim), jnp.float32))
        return (gamma, beta, mean, var)

    w1, b1 = linear(ks[0], ks[1], N_FEATURES, H1)
    bn1 = bn(ks[2], ks[3], ks[4], ks[5], H1)
    w2, b2 = linear(ks[6], ks[7], H1, H2)
    bn2 = bn(ks[8], ks[9], ks[10], ks[11], H2)
    w3, b3 = linear(ks[12], ks[13], H2, H3)
    bn3 = bn(ks[14], ks[15], ks[16], ks[17], H3)
    w4, b4 = linear(ks[18], ks[19], H3, H4)
    w5, b5 = linear(ks[20], ks[21], H4, H5)

    return (w1, b1, bn1, w2, b2, bn2, w3, b3, bn3, w4, b4, w5, b5)


def fold_params(raw):
    """Fold eval-mode BatchNorm into the preceding Linear; fc1 weights stay f32
    (tiny + precision), fc2-fc5 weights bf16, biases f32; H4 zero-padded to 128;
    fc5 weight stored transposed and padded to (8, 128); fc5 bias is a (1,1)
    scalar for SMEM."""
    (w1, b1, bn1, w2, b2, bn2, w3, b3, bn3, w4, b4, w5, b5) = raw

    def fold(w, b, bn_p):
        gamma, beta, mean, var = bn_p
        scale = gamma / jnp.sqrt(var + BN_EPS)          # (1, H)
        shift = beta - mean * scale                     # (1, H)
        return w * scale, b * scale + shift             # broadcast over rows

    w1f, b1f = fold(w1, b1, bn1)
    w2f, b2f = fold(w2, b2, bn2)
    w3f, b3f = fold(w3, b3, bn3)

    w4p = jnp.pad(w4, ((0, 0), (0, H4_PAD - H4)))       # (128, 128) zero cols
    b4p = jnp.pad(b4, ((0, 0), (0, H4_PAD - H4)))       # (1, 128)
    w5t = jnp.pad(jnp.transpose(w5),                    # (1, 64) -> (8, 128)
                  ((0, W5T_ROWS - H5), (0, H4_PAD - H4)))

    return (
        w1f.astype(jnp.float32),  b1f.astype(jnp.float32),
        w2f.astype(jnp.bfloat16), b2f.astype(jnp.float32),
        w3f.astype(jnp.bfloat16), b3f.astype(jnp.float32),
        w4p.astype(jnp.bfloat16), b4p.astype(jnp.float32),
        w5t.astype(jnp.bfloat16), b5.astype(jnp.float32),   # b5: (1, 1)
    )


def reference_forward(x, raw):
    """Pure f32 JAX reference of the PyTorch eval-mode forward."""
    (w1, b1, bn1, w2, b2, bn2, w3, b3, bn3, w4, b4, w5, b5) = raw

    def bn(h, p):
        gamma, beta, mean, var = p
        return (h - mean) / jnp.sqrt(var + BN_EPS) * gamma + beta

    h = jnp.maximum(bn(x @ w1 + b1, bn1), 0.0)
    h = jnp.maximum(bn(h @ w2 + b2, bn2), 0.0)   # dropout = identity in eval
    h = jnp.maximum(bn(h @ w3 + b3, bn3), 0.0)
    h = jnp.maximum(h @ w4 + b4, 0.0)            # dropout = identity in eval
    return h @ w5 + b5


# --------------------------------------------------------------------------- #
# Test
# --------------------------------------------------------------------------- #
if __name__ == "__main__":
    key = jax.random.PRNGKey(0)
    k_x, k_p = jax.random.split(key)

    B = 16
    x = jax.random.normal(k_x, (B, N_FEATURES), jnp.float32)

    raw = init_raw_params(k_p)
    kparams = fold_params(raw)

    out = energy_predictor(x, kparams)          # bm=128, single grid step
    out = jax.block_until_ready(out)

    ref = reference_forward(x, raw)
    assert out.shape == (B, H5)
    # bf16 matmul operands (fc2-fc5) with f32 accumulation -> ~1% tolerance.
    assert jnp.allclose(out, ref, atol=5e-2, rtol=5e-2), "mismatch vs JAX reference"
    assert jnp.all(jnp.isfinite(out))

    print("KERNEL_OK")
</pallas_src>

<mosaic_0001>
module attributes {stable_mosaic.version = 11 : i64} {
  func.func @energy_predictor_kernel(%arg0: i32, %arg1: memref<128x16xf32, #tpu.memory_space<vmem>>, %arg2: memref<16x128xf32, #tpu.memory_space<vmem>>, %arg3: memref<1x128xf32, #tpu.memory_space<vmem>>, %arg4: memref<128x256xbf16, #tpu.memory_space<vmem>>, %arg5: memref<1x256xf32, #tpu.memory_space<vmem>>, %arg6: memref<256x128xbf16, #tpu.memory_space<vmem>>, %arg7: memref<1x128xf32, #tpu.memory_space<vmem>>, %arg8: memref<128x128xbf16, #tpu.memory_space<vmem>>, %arg9: memref<1x128xf32, #tpu.memory_space<vmem>>, %arg10: memref<8x128xbf16, #tpu.memory_space<vmem>>, %arg11: memref<1x1xf32, #tpu.memory_space<smem>>, %arg12: memref<1x1x128xf32, #tpu.memory_space<vmem>>) attributes {dimension_semantics = [#tpu.dimension_semantics<parallel>], iteration_bounds = array<i64: 1>, scalar_prefetch = 0 : i64, scratch_operands = 0 : i64, tpu.core_type = #tpu.core_type<tc>, window_params = [{transform_indices = @transform_0, window_bounds = array<i64: 128, 16>}, {pipeline_mode = #tpu.pipeline_mode<synchronous>, transform_indices = @transform_1, window_bounds = array<i64: 16, 128>}, {pipeline_mode = #tpu.pipeline_mode<synchronous>, transform_indices = @transform_2, window_bounds = array<i64: 1, 128>}, {pipeline_mode = #tpu.pipeline_mode<synchronous>, transform_indices = @transform_3, window_bounds = array<i64: 128, 256>}, {pipeline_mode = #tpu.pipeline_mode<synchronous>, transform_indices = @transform_4, window_bounds = array<i64: 1, 256>}, {pipeline_mode = #tpu.pipeline_mode<synchronous>, transform_indices = @transform_5, window_bounds = array<i64: 256, 128>}, {pipeline_mode = #tpu.pipeline_mode<synchronous>, transform_indices = @transform_6, window_bounds = array<i64: 1, 128>}, {pipeline_mode = #tpu.pipeline_mode<synchronous>, transform_indices = @transform_7, window_bounds = array<i64: 128, 128>}, {pipeline_mode = #tpu.pipeline_mode<synchronous>, transform_indices = @transform_8, window_bounds = array<i64: 1, 128>}, {pipeline_mode = #tpu.pipeline_mode<synchronous>, transform_indices = @transform_9, window_bounds = array<i64: 8, 128>}, {transform_indices = @transform_10, window_bounds = array<i64: 1, 1>}, {transform_indices = @transform_11, window_bounds = array<i64: 1, 1, 128>}]} {
    %c0 = arith.constant 0 : index
    %c0_0 = arith.constant 0 : index
    %0 = vector.load %arg1[%c0, %c0_0] : memref<128x16xf32, #tpu.memory_space<vmem>>, vector<128x16xf32>
    %c0_1 = arith.constant 0 : index
    %c0_2 = arith.constant 0 : index
    %1 = vector.load %arg2[%c0_1, %c0_2] : memref<16x128xf32, #tpu.memory_space<vmem>>, vector<16x128xf32>
    %cst = arith.constant dense<0.000000e+00> : vector<128x128xf32>
    %2 = tpu.matmul %0, %1, %cst {dimension_numbers = #tpu.dot_dimension_numbers<[1], [0], [0], [1], [0, 0, 1, 1], [], []>} : vector<128x16xf32>, vector<16x128xf32>, vector<128x128xf32> -> vector<128x128xf32>
    %c0_3 = arith.constant 0 : index
    %c0_4 = arith.constant 0 : index
    %3 = vector.load %arg3[%c0_3, %c0_4] : memref<1x128xf32, #tpu.memory_space<vmem>>, vector<1x128xf32>
    %4 = vector.broadcast %3 : vector<1x128xf32> to vector<128x128xf32>
    %5 = arith.addf %2, %4 : vector<128x128xf32>
    %cst_5 = arith.constant 0.000000e+00 : f32
    %6 = vector.broadcast %cst_5 : f32 to vector<128x128xf32>
    %7 = arith.maximumf %5, %6 : vector<128x128xf32>
    %8 = arith.truncf %7 : vector<128x128xf32> to vector<128x128xbf16>
    %c0_6 = arith.constant 0 : index
    %c0_7 = arith.constant 0 : index
    %9 = vector.load %arg4[%c0_6, %c0_7] : memref<128x256xbf16, #tpu.memory_space<vmem>>, vector<128x256xbf16>
    %cst_8 = arith.constant dense<0.000000e+00> : vector<128x256xf32>
    %10 = tpu.matmul %8, %9, %cst_8 {dimension_numbers = #tpu.dot_dimension_numbers<[1], [0], [0], [1], [0, 0, 1, 1], [], []>} : vector<128x128xbf16>, vector<128x256xbf16>, vector<128x256xf32> -> vector<128x256xf32>
    %c0_9 = arith.constant 0 : index
    %c0_10 = arith.constant 0 : index
    %11 = vector.load %arg5[%c0_9, %c0_10] : memref<1x256xf32, #tpu.memory_space<vmem>>, vector<1x256xf32>
    %12 = vector.broadcast %11 : vector<1x256xf32> to vector<128x256xf32>
    %13 = arith.addf %10, %12 : vector<128x256xf32>
    %cst_11 = arith.constant 0.000000e+00 : f32
    %14 = vector.broadcast %cst_11 : f32 to vector<128x256xf32>
    %15 = arith.maximumf %13, %14 : vector<128x256xf32>
    %16 = arith.truncf %15 : vector<128x256xf32> to vector<128x256xbf16>
    %c0_12 = arith.constant 0 : index
    %c0_13 = arith.constant 0 : index
    %17 = vector.load %arg6[%c0_12, %c0_13] : memref<256x128xbf16, #tpu.memory_space<vmem>>, vector<256x128xbf16>
    %cst_14 = arith.constant dense<0.000000e+00> : vector<128x128xf32>
    %18 = tpu.matmul %16, %17, %cst_14 {dimension_numbers = #tpu.dot_dimension_numbers<[1], [0], [0], [1], [0, 0, 1, 1], [], []>} : vector<128x256xbf16>, vector<256x128xbf16>, vector<128x128xf32> -> vector<128x128xf32>
    %c0_15 = arith.constant 0 : index
    %c0_16 = arith.constant 0 : index
    %19 = vector.load %arg7[%c0_15, %c0_16] : memref<1x128xf32, #tpu.memory_space<vmem>>, vector<1x128xf32>
    %20 = vector.broadcast %19 : vector<1x128xf32> to vector<128x128xf32>
    %21 = arith.addf %18, %20 : vector<128x128xf32>
    %cst_17 = arith.constant 0.000000e+00 : f32
    %22 = vector.broadcast %cst_17 : f32 to vector<128x128xf32>
    %23 = arith.maximumf %21, %22 : vector<128x128xf32>
    %24 = arith.truncf %23 : vector<128x128xf32> to vector<128x128xbf16>
    %c0_18 = arith.constant 0 : index
    %c0_19 = arith.constant 0 : index
    %25 = vector.load %arg8[%c0_18, %c0_19] : memref<128x128xbf16, #tpu.memory_space<vmem>>, vector<128x128xbf16>
    %cst_20 = arith.constant dense<0.000000e+00> : vector<128x128xf32>
    %26 = tpu.matmul %24, %25, %cst_20 {dimension_numbers = #tpu.dot_dimension_numbers<[1], [0], [0], [1], [0, 0, 1, 1], [], []>} : vector<128x128xbf16>, vector<128x128xbf16>, vector<128x128xf32> -> vector<128x128xf32>
    %c0_21 = arith.constant 0 : index
    %c0_22 = arith.constant 0 : index
    %27 = vector.load %arg9[%c0_21, %c0_22] : memref<1x128xf32, #tpu.memory_space<vmem>>, vector<1x128xf32>
    %28 = vector.broadcast %27 : vector<1x128xf32> to vector<128x128xf32>
    %29 = arith.addf %26, %28 : vector<128x128xf32>
    %cst_23 = arith.constant 0.000000e+00 : f32
    %30 = vector.broadcast %cst_23 : f32 to vector<128x128xf32>
    %31 = arith.maximumf %29, %30 : vector<128x128xf32>
    %c0_24 = arith.constant 0 : index
    %c0_25 = arith.constant 0 : index
    %32 = vector.load %arg10[%c0_24, %c0_25] : memref<8x128xbf16, #tpu.memory_space<vmem>>, vector<8x128xbf16>
    %33 = arith.truncf %31 : vector<128x128xf32> to vector<128x128xbf16>
    %cst_26 = arith.constant dense<0.000000e+00> : vector<8x128xf32>
    %34 = tpu.matmul %32, %33, %cst_26 {dimension_numbers = #tpu.dot_dimension_numbers<[1], [1], [0], [0], [0, 0, 1, 0], [], []>} : vector<8x128xbf16>, vector<128x128xbf16>, vector<8x128xf32> -> vector<8x128xf32>
    %35 = vector.extract_strided_slice %34 {offsets = [0, 0], sizes = [1, 128], strides = [1, 1]} : vector<8x128xf32> to vector<1x128xf32>
    %c0_27 = arith.constant 0 : index
    %c0_28 = arith.constant 0 : index
    %36 = memref.load %arg11[%c0_27, %c0_28] : memref<1x1xf32, #tpu.memory_space<smem>>
    %37 = vector.broadcast %36 : f32 to vector<1x128xf32>
    %38 = arith.addf %35, %37 : vector<1x128xf32>
    %c0_29 = arith.constant 0 : index
    %c0_30 = arith.constant 0 : index
    %c0_31 = arith.constant 0 : index
    %39 = vector.load %arg12[%c0_29, %c0_30, %c0_31] : memref<1x1x128xf32, #tpu.memory_space<vmem>>, vector<1x1x128xf32>
    %40 = vector.shape_cast %39 : vector<1x1x128xf32> to vector<1x128xf32>
    %41 = vector.shape_cast %38 : vector<1x128xf32> to vector<1x1x128xf32>
    tpu.vector_store %arg12[%c0_29, %c0_30, %c0_31], %41 {strides = array<i32>} : memref<1x1x128xf32, #tpu.memory_space<vmem>>, vector<1x1x128xf32>,
    return
  }
  func.func @transform_0(%arg0: i32) -> (i32, i32) {
    %c0_i32 = arith.constant 0 : i32
    %c0_i32_0 = arith.constant 0 : i32
    return %arg0, %c0_i32 : i32, i32
  }
  func.func @transform_1(%arg0: i32) -> (i32, i32) {
    %c0_i32 = arith.constant 0 : i32
    %c0_i32_0 = arith.constant 0 : i32
    %c0_i32_1 = arith.constant 0 : i32
    return %c0_i32, %c0_i32_0 : i32, i32
  }
  func.func @transform_2(%arg0: i32) -> (i32, i32) {
    %c0_i32 = arith.constant 0 : i32
    %c0_i32_0 = arith.constant 0 : i32
    %c0_i32_1 = arith.constant 0 : i32
    return %c0_i32, %c0_i32_0 : i32, i32
  }
  func.func @transform_3(%arg0: i32) -> (i32, i32) {
    %c0_i32 = arith.constant 0 : i32
    %c0_i32_0 = arith.constant 0 : i32
    %c0_i32_1 = arith.constant 0 : i32
    return %c0_i32, %c0_i32_0 : i32, i32
  }
  func.func @transform_4(%arg0: i32) -> (i32, i32) {
    %c0_i32 = arith.constant 0 : i32
    %c0_i32_0 = arith.constant 0 : i32
    %c0_i32_1 = arith.constant 0 : i32
    return %c0_i32, %c0_i32_0 : i32, i32
  }
  func.func @transform_5(%arg0: i32) -> (i32, i32) {
    %c0_i32 = arith.constant 0 : i32
    %c0_i32_0 = arith.constant 0 : i32
    %c0_i32_1 = arith.constant 0 : i32
    return %c0_i32, %c0_i32_0 : i32, i32
  }
  func.func @transform_6(%arg0: i32) -> (i32, i32) {
    %c0_i32 = arith.constant 0 : i32
    %c0_i32_0 = arith.constant 0 : i32
    %c0_i32_1 = arith.constant 0 : i32
    return %c0_i32, %c0_i32_0 : i32, i32
  }
  func.func @transform_7(%arg0: i32) -> (i32, i32) {
    %c0_i32 = arith.constant 0 : i32
    %c0_i32_0 = arith.constant 0 : i32
    %c0_i32_1 = arith.constant 0 : i32
    return %c0_i32, %c0_i32_0 : i32, i32
  }
  func.func @transform_8(%arg0: i32) -> (i32, i32) {
    %c0_i32 = arith.constant 0 : i32
    %c0_i32_0 = arith.constant 0 : i32
    %c0_i32_1 = arith.constant 0 : i32
    return %c0_i32, %c0_i32_0 : i32, i32
  }
  func.func @transform_9(%arg0: i32) -> (i32, i32) {
    %c0_i32 = arith.constant 0 : i32
    %c0_i32_0 = arith.constant 0 : i32
    %c0_i32_1 = arith.constant 0 : i32
    return %c0_i32, %c0_i32_0 : i32, i32
  }
  func.func @transform_10(%arg0: i32) -> (i32, i32) {
    %c0_i32 = arith.constant 0 : i32
    %c0_i32_0 = arith.constant 0 : i32
    %c0_i32_1 = arith.constant 0 : i32
    return %c0_i32, %c0_i32_0 : i32, i32
  }
  func.func @transform_11(%arg0: i32) -> (i32, i32, i32) {
    %c0_i32 = arith.constant 0 : i32
    %c0_i32_0 = arith.constant 0 : i32
    %c0_i32_1 = arith.constant 0 : i32
    return %arg0, %c0_i32, %c0_i32_0 : i32, i32, i32
  }
}

</mosaic_0001>

<llo_original>
// kernel: energy_predictor.1
$region0: #{energy_predictor.1}
  #allocation0 [shape = 'u32[]', space=smem, size = 0x4, offset = 0x4, fixed_abs, tag = 'smem constant byte address 0x4 - core index']
  #allocation1 [shape = 'u32[144,128]{1,0:T(1,128)}', space=vmem, size = 0x12000, scoped, tag = 'internal scratch']
  #allocation2 [shape = 'f32[1,1]{1,0:T(1,128)S(6)}', space=smem, size = 0x200, scoped, tag = 'scoped memory for energy_predictor.1']
  %s0 = inlined_call_operand.vmem [shape: f32[128,16], index: 0, kind: input, shape index: {}]
  %s1 = inlined_call_operand.vmem [shape: f32[16,128], index: 1, kind: input, shape index: {}]
  %s2 = inlined_call_operand.vmem [shape: f32[1,128], index: 2, kind: input, shape index: {}]
  %s3 = inlined_call_operand.vmem [shape: bf16[128,256], index: 3, kind: input, shape index: {}]
  %s4 = inlined_call_operand.vmem [shape: f32[1,256], index: 4, kind: input, shape index: {}]
  %s5 = inlined_call_operand.hbm [shape: bf16[256,128], index: 5, kind: input, shape index: {}]
  %s6 = inlined_call_operand.vmem [shape: f32[1,128], index: 6, kind: input, shape index: {}]
  %s7 = inlined_call_operand.hbm [shape: bf16[128,128], index: 7, kind: input, shape index: {}]
  %s8 = inlined_call_operand.vmem [shape: f32[1,128], index: 8, kind: input, shape index: {}]
  %s9 = inlined_call_operand.vmem [shape: bf16[8,128], index: 9, kind: input, shape index: {}]
  %s10 = inlined_call_operand.<no memory space> [shape: f32[1,1], index: 10, kind: input, shape index: {}]
  %s11 = inlined_call_operand.vmem [shape: f32[1,1,128], index: 11, kind: output, shape index: {}]
  %s12 = sld [smem:[#allocation0]]
  $region62: #{energy_predictor.1} parent=0
    _
  %s14 = ssub.s32 1, %s12
  %s15 = scalar_select 0, %s14, %s12
  %16 = sst [smem:[#allocation2]] %s10
  $region1: #{energy_predictor.1} parent=0
    #allocation3 [shape = 'u8[65536]{0}', space=vmem, size = 0x10000, scoped, tag = 'input window, operand 5, single buffered']
    #allocation4 [shape = 's32[1]{0}', space=sflag, size = 0x4, scoped, tag = 'scoped memory for energy_predictor.1']
    #allocation5 [shape = 'u8[32768]{0}', space=vmem, size = 0x8000, scoped, tag = 'input window, operand 7, single buffered']
    #allocation6 [shape = 's32[1]{0}', space=sflag, size = 0x4, scoped, tag = 'scoped memory for energy_predictor.1']
    %17 = vsyncpa [#allocation4], 0
    %18 = vsyncpa [#allocation6], 0
    // Predicated region
    $region2: #{energy_predictor.1} parent=1 // pred_check
      _
    $region3: #{energy_predictor.1} parent=1 // pred_check_branch
      %20 = sbr.rel (0) target = $region5
    $region4: #{energy_predictor.1} parent=1 // pred_region
      _
    $region5: #{energy_predictor.1} parent=1 // pred_fallthru
      _
    // Predicated region
    $region6: #{energy_predictor.1} parent=1 // pred_check
      _
    $region7: #{energy_predictor.1} parent=1 // pred_check_branch
      %22 = sbr.rel (0) target = $region9
    $region8: #{energy_predictor.1} parent=1 // pred_region
      _
    $region9: #{energy_predictor.1} parent=1 // pred_fallthru
      _
    // Predicated region
    $region10: #{energy_predictor.1} parent=1 // pred_check
      _
    $region11: #{energy_predictor.1} parent=1 // pred_check_branch
      %24 = sbr.rel (0) target = $region13
    $region12: #{energy_predictor.1} parent=1 // pred_region
      _
    $region13: #{energy_predictor.1} parent=1 // pred_fallthru
      _
    // Predicated region
    $region14: #{energy_predictor.1} parent=1 // pred_check
      _
    $region15: #{energy_predictor.1} parent=1 // pred_check_branch
      %26 = sbr.rel (0) target = $region17
    $region16: #{energy_predictor.1} parent=1 // pred_region
      _
    $region17: #{energy_predictor.1} parent=1 // pred_fallthru
      _
    // Predicated region
    $region18: #{energy_predictor.1} parent=1 // pred_check
      _
    $region19: #{energy_predictor.1} parent=1 // pred_check_branch
      %28 = sbr.rel (0) target = $region21
    $region20: #{energy_predictor.1} parent=1 // pred_region
      _
    $region21: #{energy_predictor.1} parent=1 // pred_fallthru
      _
    // Predicated region
    $region22: #{energy_predictor.1} parent=1 // pred_check
      _
    $region23: #{energy_predictor.1} parent=1 // pred_check_branch
      %30 = sbr.rel (0) target = $region25
    $region24: #{energy_predictor.1} parent=1 // pred_region
      %s32 = ssub.s32 2048, 2048
      %33 = vsyncadd [#allocation4], %s32
      %s34 = sshll.u32 [#allocation3], 4
      %s35 = int_to_ptr.vmem [resolvable:$true] %s34
      %40 = dma.hbm_to_vmem [thread:$0]  %s5, 2048, %s35, [#allocation4], 64, 64, 4
    $region25: #{energy_predictor.1} parent=1 // pred_fallthru
      _
    // Predicated region
    $region26: #{energy_predictor.1} parent=1 // pred_check
      _
    $region27: #{energy_predictor.1} parent=1 // pred_check_branch
      %42 = sbr.rel (0) target = $region29
    $region28: #{energy_predictor.1} parent=1 // pred_region
      _
    $region29: #{energy_predictor.1} parent=1 // pred_fallthru
      _
    // Predicated region
    $region30: #{energy_predictor.1} parent=1 // pred_check
      _
    $region31: #{energy_predictor.1} parent=1 // pred_check_branch
      %44 = sbr.rel (0) target = $region33
    $region32: #{energy_predictor.1} parent=1 // pred_region
      %s46 = ssub.s32 1024, 1024
      %47 = vsyncadd [#allocation6], %s46
      %s48 = sshll.u32 [#allocation5], 4
      %s49 = int_to_ptr.vmem [resolvable:$true] %s48
      %54 = dma.hbm_to_vmem [thread:$0]  %s7, 1024, %s49, [#allocation6], 64, 64, 4
    $region33: #{energy_predictor.1} parent=1 // pred_fallthru
      _
    // Predicated region
    $region34: #{energy_predictor.1} parent=1 // pred_check
      _
    $region35: #{energy_predictor.1} parent=1 // pred_check_branch
      %56 = sbr.rel (0) target = $region37
    $region36: #{energy_predictor.1} parent=1 // pred_region
      _
    $region37: #{energy_predictor.1} parent=1 // pred_fallthru
      _
    // Predicated region
    $region38: #{energy_predictor.1} parent=1 // pred_check
      _
    $region39: #{energy_predictor.1} parent=1 // pred_check_branch
      %58 = sbr.rel (0) target = $region41
    $region40: #{energy_predictor.1} parent=1 // pred_region
      _
    $region41: #{energy_predictor.1} parent=1 // pred_fallthru
      _
    // Predicated region
    $region42: #{energy_predictor.1} parent=1 // pred_check
      _
    $region43: #{energy_predictor.1} parent=1 // pred_check_branch
      %60 = sbr.rel (0) target = $region45
    $region44: #{energy_predictor.1} parent=1 // pred_region
      _
    $region45: #{energy_predictor.1} parent=1 // pred_fallthru
      _
    // Predicated region
    $region46: #{energy_predictor.1} parent=1 // pred_check
      _
    $region47: #{energy_predictor.1} parent=1 // pred_check_branch
      %62 = sbr.rel (0) target = $region49
    $region48: #{energy_predictor.1} parent=1 // pred_region
      %63 = dma.done [#allocation4], 2048
    $region49: #{energy_predictor.1} parent=1 // pred_fallthru
      _
    // Predicated region
    $region50: #{energy_predictor.1} parent=1 // pred_check
      _
    $region51: #{energy_predictor.1} parent=1 // pred_check_branch
      %65 = sbr.rel (0) target = $region53
    $region52: #{energy_predictor.1} parent=1 // pred_region
      %66 = dma.done [#allocation6], 1024
    $region53: #{energy_predictor.1} parent=1 // pred_fallthru
      _
    %v68 = vld [vmem:[%s0] sm:$0xff]
    %v69 = vld [vmem:[%s0 + $0x8] sm:$0xff]
    %v70 = vld [vmem:[%s0 + $0x10] sm:$0xff]
    %v71 = vld [vmem:[%s0 + $0x18] sm:$0xff]
    %v72 = vld [vmem:[%s0 + $0x20] sm:$0xff]
    %v73 = vld [vmem:[%s0 + $0x28] sm:$0xff]
    %v74 = vld [vmem:[%s0 + $0x30] sm:$0xff]
    %v75 = vld [vmem:[%s0 + $0x38] sm:$0xff]
    %v76 = vld [vmem:[%s0 + $0x40] sm:$0xff]
    %v77 = vld [vmem:[%s0 + $0x48] sm:$0xff]
    %v78 = vld [vmem:[%s0 + $0x50] sm:$0xff]
    %v79 = vld [vmem:[%s0 + $0x58] sm:$0xff]
    %v80 = vld [vmem:[%s0 + $0x60] sm:$0xff]
    %v81 = vld [vmem:[%s0 + $0x68] sm:$0xff]
    %v82 = vld [vmem:[%s0 + $0x70] sm:$0xff]
    %v83 = vld [vmem:[%s0 + $0x78] sm:$0xff]
    %v84 = vld [vmem:[%s1] sm:$0xff]
    %v85 = vld [vmem:[%s1 + $0x8] sm:$0xff]
    %v86 = vld [vmem:[%s2] sm:$0x1]
    %v88 = vlaneseq
    %v89 = vshrl.u32 %v88, 7
    %v90 = vsub.s32 0, %v89
    %v91 = vrot.slane %v86, %v90
    %vm93 = vcmask 130048
    %v95 = vsel %vm93, %v68, 0
    %v98 = vsel %vm93, %v69, 0
    %v101 = vsel %vm93, %v70, 0
    %v104 = vsel %vm93, %v71, 0
    %v107 = vsel %vm93, %v72, 0
    %v110 = vsel %vm93, %v73, 0
    %v113 = vsel %vm93, %v74, 0
    %v116 = vsel %vm93, %v75, 0
    %v119 = vsel %vm93, %v76, 0
    %v122 = vsel %vm93, %v77, 0
    %v125 = vsel %vm93, %v78, 0
    %v128 = vsel %vm93, %v79, 0
    %v131 = vsel %vm93, %v80, 0
    %v134 = vsel %vm93, %v81, 0
    %v137 = vsel %vm93, %v82, 0
    %v140 = vsel %vm93, %v83, 0
    %142 = vmatprep.subr.mxu0 0.0
    %143 = vmatpush1.msra.mxu0 %v84
    %144 = vmatprep.subr.mxu0 0.0
    %145 = vmatpush1.msra.mxu0 %v85
    %146 = vmatprep.subr.mxu0 0.0
    %147 = vmatpush1.msra.mxu0 0.0
    %148 = vmatprep.subr.mxu0 0.0
    %149 = vmatpush1.msra.mxu0 0.0
    %150 = vmatprep.subr.mxu0 0.0
    %151 = vmatpush1.msra.mxu0 0.0
    %152 = vmatprep.subr.mxu0 0.0
    %153 = vmatpush1.msra.mxu0 0.0
    %154 = vmatprep.subr.mxu0 0.0
    %155 = vmatpush1.msra.mxu0 0.0
    %156 = vmatprep.subr.mxu0 0.0
    %157 = vmatpush1.msra.mxu0 0.0
    %158 = vmatprep.subr.mxu0 0.0
    %159 = vmatpush1.msra.mxu0 0.0
    %160 = vmatprep.subr.mxu0 0.0
    %161 = vmatpush1.msra.mxu0 0.0
    %162 = vmatprep.subr.mxu0 0.0
    %163 = vmatpush1.msra.mxu0 0.0
    %164 = vmatprep.subr.mxu0 0.0
    %165 = vmatpush1.msra.mxu0 0.0
    %166 = vmatprep.subr.mxu0 0.0
    %167 = vmatpush1.msra.mxu0 0.0
    %168 = vmatprep.subr.mxu0 0.0
    %169 = vmatpush1.msra.mxu0 0.0
    %170 = vmatprep.subr.mxu0 0.0
    %171 = vmatpush1.msra.mxu0 0.0
    %172 = vmatprep.subr.mxu0 0.0
    %173 = vmatpush1.msra.mxu0 0.0
    %174 = vmatprep.subr.mxu0 0.0
    %175 = vmatpush1.msra.mxu0 0.0
    %176 = vmatprep.subr.mxu0 0.0
    %177 = vmatpush1.msra.mxu0 0.0
    %178 = vmatprep.subr.mxu0 0.0
    %179 = vmatpush1.msra.mxu0 0.0
    %180 = vmatprep.subr.mxu0 0.0
    %181 = vmatpush1.msra.mxu0 0.0
    %182 = vmatprep.subr.mxu0 0.0
    %183 = vmatpush1.msra.mxu0 0.0
    %184 = vmatprep.subr.mxu0 0.0
    %185 = vmatpush1.msra.mxu0 0.0
    %186 = vmatprep.subr.mxu0 0.0
    %187 = vmatpush1.msra.mxu0 0.0
    %188 = vmatprep.subr.mxu0 0.0
    %189 = vmatpush1.msra.mxu0 0.0
    %190 = vmatprep.subr.mxu0 0.0
    %191 = vmatpush1.msra.mxu0 0.0
    %192 = vmatprep.subr.mxu0 0.0
    %193 = vmatpush1.msra.mxu0 0.0
    %194 = vmatprep.subr.mxu0 0.0
    %195 = vmatpush1.msra.mxu0 0.0
    %196 = vmatprep.subr.mxu0 0.0
    %197 = vmatpush1.msra.mxu0 0.0
    %198 = vmatprep.subr.mxu0 0.0
    %199 = vmatpush1.msra.mxu0 0.0
    %200 = vmatprep.subr.mxu0 0.0
    %201 = vmatpush1.msra.mxu0 0.0
    %202 = vmatprep.subr.mxu0 0.0
    %203 = vmatpush1.msra.mxu0 0.0
    %204 = vmatprep.subr.mxu0 0.0
    %205 = vmatpush1.msra.mxu0 0.0
    %206 = vmatprep.mubr.f32.mxu0 0.0
    %207 = vmatmul.mubr.f32.gmra.mrb[0].mxu0 %v95
    %v208 = vpop.f32.mrb[0].mxu0
    %v209 = vadd.f32 %v91, %v208
    %v210 = vpop.f32.mrb[0].mxu0
    %211 = vmatprep.mubr.f32.mxu0 0.0
    %212 = vmatmul.mubr.f32.gmra.mrb[0].mxu0 %v98
    %v213 = vpop.f32.mrb[0].mxu0
    %v214 = vadd.f32 %v91, %v213
    %v215 = vpop.f32.mrb[0].mxu0
    %216 = vmatprep.mubr.f32.mxu0 0.0
    %217 = vmatmul.mubr.f32.gmra.mrb[0].mxu0 %v101
    %v218 = vpop.f32.mrb[0].mxu0
    %v219 = vadd.f32 %v91, %v218
    %v220 = vpop.f32.mrb[0].mxu0
    %221 = vmatprep.mubr.f32.mxu0 0.0
    %222 = vmatmul.mubr.f32.gmra.mrb[0].mxu0 %v104
    %v223 = vpop.f32.mrb[0].mxu0
    %v224 = vadd.f32 %v91, %v223
    %v225 = vpop.f32.mrb[0].mxu0
    %226 = vmatprep.mubr.f32.mxu0 0.0
    %227 = vmatmul.mubr.f32.gmra.mrb[0].mxu0 %v107
    %v228 = vpop.f32.mrb[0].mxu0
    %v229 = vadd.f32 %v91, %v228
    %v230 = vpop.f32.mrb[0].mxu0
    %231 = vmatprep.mubr.f32.mxu0 0.0
    %232 = vmatmul.mubr.f32.gmra.mrb[0].mxu0 %v110
    %v233 = vpop.f32.mrb[0].mxu0
    %v234 = vadd.f32 %v91, %v233
    %v235 = vpop.f32.mrb[0].mxu0
    %236 = vmatprep.mubr.f32.mxu0 0.0
    %237 = vmatmul.mubr.f32.gmra.mrb[0].mxu0 %v113
    %v238 = vpop.f32.mrb[0].mxu0
    %v239 = vadd.f32 %v91, %v238
    %v240 = vpop.f32.mrb[0].mxu0
    %241 = vmatprep.mubr.f32.mxu0 0.0
    %242 = vmatmul.mubr.f32.gmra.mrb[0].mxu0 %v116
    %v243 = vpop.f32.mrb[0].mxu0
    %v244 = vadd.f32 %v91, %v243
    %v245 = vpop.f32.mrb[0].mxu0
    %246 = vmatprep.mubr.f32.mxu0 0.0
    %247 = vmatmul.mubr.f32.gmra.mrb[0].mxu0 %v119
    %v248 = vpop.f32.mrb[0].mxu0
    %v249 = vadd.f32 %v91, %v248
    %v250 = vpop.f32.mrb[0].mxu0
    %251 = vmatprep.mubr.f32.mxu0 0.0
    %252 = vmatmul.mubr.f32.gmra.mrb[0].mxu0 %v122
    %v253 = vpop.f32.mrb[0].mxu0
    %v254 = vadd.f32 %v91, %v253
    %v255 = vpop.f32.mrb[0].mxu0
    %256 = vmatprep.mubr.f32.mxu0 0.0
    %257 = vmatmul.mubr.f32.gmra.mrb[0].mxu0 %v125
    %v258 = vpop.f32.mrb[0].mxu0
    %v259 = vadd.f32 %v91, %v258
    %v260 = vpop.f32.mrb[0].mxu0
    %261 = vmatprep.mubr.f32.mxu0 0.0
    %262 = vmatmul.mubr.f32.gmra.mrb[0].mxu0 %v128
    %v263 = vpop.f32.mrb[0].mxu0
    %v264 = vadd.f32 %v91, %v263
    %v265 = vpop.f32.mrb[0].mxu0
    %266 = vmatprep.mubr.f32.mxu0 0.0
    %267 = vmatmul.mubr.f32.gmra.mrb[0].mxu0 %v131
    %v268 = vpop.f32.mrb[0].mxu0
    %v269 = vadd.f32 %v91, %v268
    %v270 = vpop.f32.mrb[0].mxu0
    %271 = vmatprep.mubr.f32.mxu0 0.0
    %272 = vmatmul.mubr.f32.gmra.mrb[0].mxu0 %v134
    %v273 = vpop.f32.mrb[0].mxu0
    %v274 = vadd.f32 %v91, %v273
    %v275 = vpop.f32.mrb[0].mxu0
    %276 = vmatprep.mubr.f32.mxu0 0.0
    %277 = vmatmul.mubr.f32.gmra.mrb[0].mxu0 %v137
    %v278 = vpop.f32.mrb[0].mxu0
    %v279 = vadd.f32 %v91, %v278
    %v280 = vpop.f32.mrb[0].mxu0
    %281 = vmatprep.mubr.f32.mxu0 0.0
    %282 = vmatmul.mubr.f32.gmra.mrb[0].mxu0 %v140
    %v283 = vpop.f32.mrb[0].mxu0
    %v284 = vadd.f32 %v91, %v283
    %v285 = vpop.f32.mrb[0].mxu0
    %286 = vdwg.mxu0
    %v287 = vmax.f32 %v209, 0.0
    %v288 = vmax.f32 %v214, 0.0
    %v289 = vmax.f32 %v219, 0.0
    %v290 = vmax.f32 %v224, 0.0
    %v291 = vmax.f32 %v229, 0.0
    %v292 = vmax.f32 %v234, 0.0
    %v293 = vmax.f32 %v239, 0.0
    %v294 = vmax.f32 %v244, 0.0
    %v295 = vmax.f32 %v249, 0.0
    %v296 = vmax.f32 %v254, 0.0
    %v297 = vmax.f32 %v259, 0.0
    %v298 = vmax.f32 %v264, 0.0
    %v299 = vmax.f32 %v269, 0.0
    %v300 = vmax.f32 %v274, 0.0
    %v301 = vmax.f32 %v279, 0.0
    %v302 = vmax.f32 %v284, 0.0
    %v303 = vpack.c.bf16 %v288, %v287
    %v304 = vpack.c.bf16 %v290, %v289
    %v305 = vpack.c.bf16 %v292, %v291
    %v306 = vpack.c.bf16 %v294, %v293
    %v307 = vpack.c.bf16 %v296, %v295
    %v308 = vpack.c.bf16 %v298, %v297
    %v309 = vpack.c.bf16 %v300, %v299
    %v310 = vpack.c.bf16 %v302, %v301
    %v311 = vld [vmem:[%s3] sm:$0xff]
    %v312 = vld [vmem:[%s3 + $0x8] sm:$0xff]
    %v313 = vld [vmem:[%s3 + $0x10] sm:$0xff]
    %v314 = vld [vmem:[%s3 + $0x18] sm:$0xff]
    %v315 = vld [vmem:[%s3 + $0x20] sm:$0xff]
    %v316 = vld [vmem:[%s3 + $0x28] sm:$0xff]
    %v317 = vld [vmem:[%s3 + $0x30] sm:$0xff]
    %v318 = vld [vmem:[%s3 + $0x38] sm:$0xff]
    %v319 = vld [vmem:[%s3 + $0x40] sm:$0xff]
    %v320 = vld [vmem:[%s3 + $0x48] sm:$0xff]
    %v321 = vld [vmem:[%s3 + $0x50] sm:$0xff]
    %v322 = vld [vmem:[%s3 + $0x58] sm:$0xff]
    %v323 = vld [vmem:[%s3 + $0x60] sm:$0xff]
    %v324 = vld [vmem:[%s3 + $0x68] sm:$0xff]
    %v325 = vld [vmem:[%s3 + $0x70] sm:$0xff]
    %v326 = vld [vmem:[%s3 + $0x78] sm:$0xff]
    %v327 = vld [vmem:[%s4] sm:$0x3]
    %v329 = vlaneseq
    %v330 = vshrl.u32 %v329, 7
    %v331 = vsub.s32 0, %v330
    %v332 = vrot.slane %v327, %v331
    %v333 = vlaneseq
    %v334 = vshrl.u32 %v333, 7
    %v335 = vsub.s32 1, %v334
    %v336 = vrot.slane %v327, %v335
    %v355 = vunpack.c.l.b16 %v311
    %v356 = vunpack.c.h.b16 %v311
    %v357 = vunpack.c.l.b16 %v312
    %v358 = vunpack.c.h.b16 %v312
    %v359 = vunpack.c.l.b16 %v313
    %v360 = vunpack.c.h.b16 %v313
    %v361 = vunpack.c.l.b16 %v314
    %v362 = vunpack.c.h.b16 %v314
    %v363 = vunpack.c.l.b16 %v315
    %v364 = vunpack.c.h.b16 %v315
    %v365 = vunpack.c.l.b16 %v316
    %v366 = vunpack.c.h.b16 %v316
    %v367 = vunpack.c.l.b16 %v317
    %v368 = vunpack.c.h.b16 %v317
    %v369 = vunpack.c.l.b16 %v318
    %v370 = vunpack.c.h.b16 %v318
    %v371 = vunpack.c.l.b16 %v319
    %v372 = vunpack.c.h.b16 %v319
    %v373 = vunpack.c.l.b16 %v320
    %v374 = vunpack.c.h.b16 %v320
    %v375 = vunpack.c.l.b16 %v321
    %v376 = vunpack.c.h.b16 %v321
    %v377 = vunpack.c.l.b16 %v322
    %v378 = vunpack.c.h.b16 %v322
    %v379 = vunpack.c.l.b16 %v323
    %v380 = vunpack.c.h.b16 %v323
    %v381 = vunpack.c.l.b16 %v324
    %v382 = vunpack.c.h.b16 %v324
    %v383 = vunpack.c.l.b16 %v325
    %v384 = vunpack.c.h.b16 %v325
    %v385 = vunpack.c.l.b16 %v326
    %v386 = vunpack.c.h.b16 %v326
    %v387 = vpack.c.b16 %v357, %v355
    %v388 = vpack.c.b16 %v358, %v356
    %v389 = vpack.c.b16 %v361, %v359
    %v390 = vpack.c.b16 %v362, %v360
    %v391 = vpack.c.b16 %v365, %v363
    %v392 = vpack.c.b16 %v366, %v364
    %v393 = vpack.c.b16 %v369, %v367
    %v394 = vpack.c.b16 %v370, %v368
    %v395 = vpack.c.b16 %v373, %v371
    %v396 = vpack.c.b16 %v374, %v372
    %v397 = vpack.c.b16 %v377, %v375
    %v398 = vpack.c.b16 %v378, %v376
    %v399 = vpack.c.b16 %v381, %v379
    %v400 = vpack.c.b16 %v382, %v380
    %v401 = vpack.c.b16 %v385, %v383
    %v402 = vpack.c.b16 %v386, %v384
    %419 = vmatprep.subr.bf16.mxu0 %v388
    %420 = vmatpush1.bf16.msra.mxu0 %v387
    %421 = vmatprep.subr.bf16.mxu0 %v390
    %422 = vmatpush1.bf16.msra.mxu0 %v389
    %423 = vmatprep.subr.bf16.mxu0 %v392
    %424 = vmatpush1.bf16.msra.mxu0 %v391
    %425 = vmatprep.subr.bf16.mxu0 %v394
    %426 = vmatpush1.bf16.msra.mxu0 %v393
    %427 = vmatprep.subr.bf16.mxu0 %v396
    %428 = vmatpush1.bf16.msra.mxu0 %v395
    %429 = vmatprep.subr.bf16.mxu0 %v398
    %430 = vmatpush1.bf16.msra.mxu0 %v397
    %431 = vmatprep.subr.bf16.mxu0 %v400
    %432 = vmatpush1.bf16.msra.mxu0 %v399
    %433 = vmatprep.subr.bf16.mxu0 %v402
    %434 = vmatpush1.bf16.msra.mxu0 %v401
    %435 = vmatprep.subr.bf16.mxu0 0
    %436 = vmatpush1.bf16.msra.mxu0 0
    %437 = vmatprep.subr.bf16.mxu0 0
    %438 = vmatpush1.bf16.msra.mxu0 0
    %439 = vmatprep.subr.bf16.mxu0 0
    %440 = vmatpush1.bf16.msra.mxu0 0
    %441 = vmatprep.subr.bf16.mxu0 0
    %442 = vmatpush1.bf16.msra.mxu0 0
    %443 = vmatprep.subr.bf16.mxu0 0
    %444 = vmatpush1.bf16.msra.mxu0 0
    %445 = vmatprep.subr.bf16.mxu0 0
    %446 = vmatpush1.bf16.msra.mxu0 0
    %447 = vmatprep.subr.bf16.mxu0 0
    %448 = vmatpush1.bf16.msra.mxu0 0
    %449 = vmatprep.subr.bf16.mxu0 0
    %450 = vmatpush1.bf16.msra.mxu0 0
    %451 = vmatprep.mubr.bf16.mxu0 0
    %452 = vmatmul.mubr.bf16.gmra.mrb[0].mxu0 %v303
    %v453 = vpop.f32.mrb[0].mxu0
    %v454 = vadd.f32 %v332, %v453
    %v455 = vpop.f32.mrb[0].mxu0
    %v456 = vadd.f32 %v336, %v455
    %v457 = vpop.f32.mrb[0].mxu0
    %v458 = vadd.f32 %v332, %v457
    %v459 = vpop.f32.mrb[0].mxu0
    %v460 = vadd.f32 %v336, %v459
    %461 = vmatprep.mubr.bf16.mxu0 0
    %462 = vmatmul.mubr.bf16.gmra.mrb[0].mxu0 %v304
    %v463 = vpop.f32.mrb[0].mxu0
    %v464 = vadd.f32 %v332, %v463
    %v465 = vpop.f32.mrb[0].mxu0
    %v466 = vadd.f32 %v336, %v465
    %v467 = vpop.f32.mrb[0].mxu0
    %v468 = vadd.f32 %v332, %v467
    %v469 = vpop.f32.mrb[0].mxu0
    %v470 = vadd.f32 %v336, %v469
    %471 = vmatprep.mubr.bf16.mxu0 0
    %472 = vmatmul.mubr.bf16.gmra.mrb[0].mxu0 %v305
    %v473 = vpop.f32.mrb[0].mxu0
    %v474 = vadd.f32 %v332, %v473
    %v475 = vpop.f32.mrb[0].mxu0
    %v476 = vadd.f32 %v336, %v475
    %v477 = vpop.f32.mrb[0].mxu0
    %v478 = vadd.f32 %v332, %v477
    %v479 = vpop.f32.mrb[0].mxu0
    %v480 = vadd.f32 %v336, %v479
    %481 = vmatprep.mubr.bf16.mxu0 0
    %482 = vmatmul.mubr.bf16.gmra.mrb[0].mxu0 %v306
    %v483 = vpop.f32.mrb[0].mxu0
    %v484 = vadd.f32 %v332, %v483
    %v485 = vpop.f32.mrb[0].mxu0
    %v486 = vadd.f32 %v336, %v485
    %v487 = vpop.f32.mrb[0].mxu0
    %v488 = vadd.f32 %v332, %v487
    %v489 = vpop.f32.mrb[0].mxu0
    %v490 = vadd.f32 %v336, %v489
    %491 = vmatprep.mubr.bf16.mxu0 0
    %492 = vmatmul.mubr.bf16.gmra.mrb[0].mxu0 %v307
    %v493 = vpop.f32.mrb[0].mxu0
    %v494 = vadd.f32 %v332, %v493
    %v495 = vpop.f32.mrb[0].mxu0
    %v496 = vadd.f32 %v336, %v495
    %v497 = vpop.f32.mrb[0].mxu0
    %v498 = vadd.f32 %v332, %v497
    %v499 = vpop.f32.mrb[0].mxu0
    %v500 = vadd.f32 %v336, %v499
    %501 = vmatprep.mubr.bf16.mxu0 0
    %502 = vmatmul.mubr.bf16.gmra.mrb[0].mxu0 %v308
    %v503 = vpop.f32.mrb[0].mxu0
    %v504 = vadd.f32 %v332, %v503
    %v505 = vpop.f32.mrb[0].mxu0
    %v506 = vadd.f32 %v336, %v505
    %v507 = vpop.f32.mrb[0].mxu0
    %v508 = vadd.f32 %v332, %v507
    %v509 = vpop.f32.mrb[0].mxu0
    %v510 = vadd.f32 %v336, %v509
    %511 = vmatprep.mubr.bf16.mxu0 0
    %512 = vmatmul.mubr.bf16.gmra.mrb[0].mxu0 %v309
    %v513 = vpop.f32.mrb[0].mxu0
    %v514 = vadd.f32 %v332, %v513
    %v515 = vpop.f32.mrb[0].mxu0
    %v516 = vadd.f32 %v336, %v515
    %v517 = vpop.f32.mrb[0].mxu0
    %v518 = vadd.f32 %v332, %v517
    %v519 = vpop.f32.mrb[0].mxu0
    %v520 = vadd.f32 %v336, %v519
    %521 = vmatprep.mubr.bf16.mxu0 0
    %522 = vmatmul.mubr.bf16.gmra.mrb[0].mxu0 %v310
    %v523 = vpop.f32.mrb[0].mxu0
    %v524 = vadd.f32 %v332, %v523
    %v525 = vpop.f32.mrb[0].mxu0
    %v526 = vadd.f32 %v336, %v525
    %v527 = vpop.f32.mrb[0].mxu0
    %v528 = vadd.f32 %v332, %v527
    %v529 = vpop.f32.mrb[0].mxu0
    %v530 = vadd.f32 %v336, %v529
    %531 = vdwg.mxu0
    %v532 = vmax.f32 %v454, 0.0
    %v533 = vmax.f32 %v456, 0.0
    %v534 = vmax.f32 %v458, 0.0
    %v535 = vmax.f32 %v460, 0.0
    %v536 = vmax.f32 %v464, 0.0
    %v537 = vmax.f32 %v466, 0.0
    %v538 = vmax.f32 %v468, 0.0
    %v539 = vmax.f32 %v470, 0.0
    %v540 = vmax.f32 %v474, 0.0
    %v541 = vmax.f32 %v476, 0.0
    %v542 = vmax.f32 %v478, 0.0
    %v543 = vmax.f32 %v480, 0.0
    %v544 = vmax.f32 %v484, 0.0
    %v545 = vmax.f32 %v486, 0.0
    %v546 = vmax.f32 %v488, 0.0
    %v547 = vmax.f32 %v490, 0.0
    %v548 = vmax.f32 %v494, 0.0
    %v549 = vmax.f32 %v496, 0.0
    %v550 = vmax.f32 %v498, 0.0
    %v551 = vmax.f32 %v500, 0.0
    %v552 = vmax.f32 %v504, 0.0
    %v553 = vmax.f32 %v506, 0.0
    %v554 = vmax.f32 %v508, 0.0
    %v555 = vmax.f32 %v510, 0.0
    %v556 = vmax.f32 %v514, 0.0
    %v557 = vmax.f32 %v516, 0.0
    %v558 = vmax.f32 %v518, 0.0
    %v559 = vmax.f32 %v520, 0.0
    %v560 = vmax.f32 %v524, 0.0
    %v561 = vmax.f32 %v526, 0.0
    %v562 = vmax.f32 %v528, 0.0
    %v563 = vmax.f32 %v530, 0.0
    %v564 = vpack.c.bf16 %v534, %v532
    %v565 = vpack.c.bf16 %v535, %v533
    %v566 = vpack.c.bf16 %v538, %v536
    %v567 = vpack.c.bf16 %v539, %v537
    %v568 = vpack.c.bf16 %v542, %v540
    %v569 = vpack.c.bf16 %v543, %v541
    %v570 = vpack.c.bf16 %v546, %v544
    %v571 = vpack.c.bf16 %v547, %v545
    %v572 = vpack.c.bf16 %v550, %v548
    %v573 = vpack.c.bf16 %v551, %v549
    %v574 = vpack.c.bf16 %v554, %v552
    %v575 = vpack.c.bf16 %v555, %v553
    %v576 = vpack.c.bf16 %v558, %v556
    %v577 = vpack.c.bf16 %v559, %v557
    %v578 = vpack.c.bf16 %v562, %v560
    %v579 = vpack.c.bf16 %v563, %v561
    %v580 = vld [vmem:[#allocation3] sm:$0xf]
    %v581 = vld [vmem:[#allocation3 + $0x4] sm:$0xf]
    %v582 = vld [vmem:[#allocation3 + $0x8] sm:$0xf]
    %v583 = vld [vmem:[#allocation3 + $0xc] sm:$0xf]
    %v584 = vld [vmem:[#allocation3 + $0x10] sm:$0xf]
    %v585 = vld [vmem:[#allocation3 + $0x14] sm:$0xf]
    %v586 = vld [vmem:[#allocation3 + $0x18] sm:$0xf]
    %v587 = vld [vmem:[#allocation3 + $0x1c] sm:$0xf]
    %v588 = vld [vmem:[#allocation3 + $0x20] sm:$0xf]
    %v589 = vld [vmem:[#allocation3 + $0x24] sm:$0xf]
    %v590 = vld [vmem:[#allocation3 + $0x28] sm:$0xf]
    %v591 = vld [vmem:[#allocation3 + $0x2c] sm:$0xf]
    %v592 = vld [vmem:[#allocation3 + $0x30] sm:$0xf]
    %v593 = vld [vmem:[#allocation3 + $0x34] sm:$0xf]
    %v594 = vld [vmem:[#allocation3 + $0x38] sm:$0xf]
    %v595 = vld [vmem:[#allocation3 + $0x3c] sm:$0xf]
    %v596 = vld [vmem:[#allocation3 + $0x40] sm:$0xf]
    %v597 = vld [vmem:[#allocation3 + $0x44] sm:$0xf]
    %v598 = vld [vmem:[#allocation3 + $0x48] sm:$0xf]
    %v599 = vld [vmem:[#allocation3 + $0x4c] sm:$0xf]
    %v600 = vld [vmem:[#allocation3 + $0x50] sm:$0xf]
    %v601 = vld [vmem:[#allocation3 + $0x54] sm:$0xf]
    %v602 = vld [vmem:[#allocation3 + $0x58] sm:$0xf]
    %v603 = vld [vmem:[#allocation3 + $0x5c] sm:$0xf]
    %v604 = vld [vmem:[#allocation3 + $0x60] sm:$0xf]
    %v605 = vld [vmem:[#allocation3 + $0x64] sm:$0xf]
    %v606 = vld [vmem:[#allocation3 + $0x68] sm:$0xf]
    %v607 = vld [vmem:[#allocation3 + $0x6c] sm:$0xf]
    %v608 = vld [vmem:[#allocation3 + $0x70] sm:$0xf]
    %v609 = vld [vmem:[#allocation3 + $0x74] sm:$0xf]
    %v610 = vld [vmem:[#allocation3 + $0x78] sm:$0xf]
    %v611 = vld [vmem:[#allocation3 + $0x7c] sm:$0xf]
    %v612 = vld [vmem:[%s6] sm:$0x1]
    %v614 = vlaneseq
    %v615 = vshrl.u32 %v614, 7
    %v616 = vsub.s32 0, %v615
    %v617 = vrot.slane %v612, %v616
    %v651 = vunpack.c.l.b16 %v580
    %v652 = vunpack.c.l.b16 %v581
    %v653 = vunpack.c.l.b16 %v582
    %v654 = vunpack.c.l.b16 %v583
    %v655 = vunpack.c.l.b16 %v584
    %v656 = vunpack.c.l.b16 %v585
    %v657 = vunpack.c.l.b16 %v586
    %v658 = vunpack.c.l.b16 %v587
    %v659 = vunpack.c.l.b16 %v588
    %v660 = vunpack.c.l.b16 %v589
    %v661 = vunpack.c.l.b16 %v590
    %v662 = vunpack.c.l.b16 %v591
    %v663 = vunpack.c.l.b16 %v592
    %v664 = vunpack.c.l.b16 %v593
    %v665 = vunpack.c.l.b16 %v594
    %v666 = vunpack.c.l.b16 %v595
    %v667 = vunpack.c.l.b16 %v596
    %v668 = vunpack.c.l.b16 %v597
    %v669 = vunpack.c.l.b16 %v598
    %v670 = vunpack.c.l.b16 %v599
    %v671 = vunpack.c.l.b16 %v600
    %v672 = vunpack.c.l.b16 %v601
    %v673 = vunpack.c.l.b16 %v602
    %v674 = vunpack.c.l.b16 %v603
    %v675 = vunpack.c.l.b16 %v604
    %v676 = vunpack.c.l.b16 %v605
    %v677 = vunpack.c.l.b16 %v606
    %v678 = vunpack.c.l.b16 %v607
    %v679 = vunpack.c.l.b16 %v608
    %v680 = vunpack.c.l.b16 %v609
    %v681 = vunpack.c.l.b16 %v610
    %v682 = vunpack.c.l.b16 %v611
    %v683 = vpack.c.b16 %v652, %v651
    %v684 = vpack.c.b16 %v654, %v653
    %v685 = vpack.c.b16 %v656, %v655
    %v686 = vpack.c.b16 %v658, %v657
    %v687 = vpack.c.b16 %v660, %v659
    %v688 = vpack.c.b16 %v662, %v661
    %v689 = vpack.c.b16 %v664, %v663
    %v690 = vpack.c.b16 %v666, %v665
    %v691 = vpack.c.b16 %v668, %v667
    %v692 = vpack.c.b16 %v670, %v669
    %v693 = vpack.c.b16 %v672, %v671
    %v694 = vpack.c.b16 %v674, %v673
    %v695 = vpack.c.b16 %v676, %v675
    %v696 = vpack.c.b16 %v678, %v677
    %v697 = vpack.c.b16 %v680, %v679
    %v698 = vpack.c.b16 %v682, %v681
    %715 = vmatprep.subr.bf16.mxu0 0
    %716 = vmatpush1.bf16.msra.mxu0 %v683
    %717 = vmatprep.subr.bf16.mxu0 0
    %718 = vmatpush1.bf16.msra.mxu0 %v684
    %719 = vmatprep.subr.bf16.mxu0 0
    %720 = vmatpush1.bf16.msra.mxu0 %v685
    %721 = vmatprep.subr.bf16.mxu0 0
    %722 = vmatpush1.bf16.msra.mxu0 %v686
    %723 = vmatprep.subr.bf16.mxu0 0
    %724 = vmatpush1.bf16.msra.mxu0 %v687
    %725 = vmatprep.subr.bf16.mxu0 0
    %726 = vmatpush1.bf16.msra.mxu0 %v688
    %727 = vmatprep.subr.bf16.mxu0 0
    %728 = vmatpush1.bf16.msra.mxu0 %v689
    %729 = vmatprep.subr.bf16.mxu0 0
    %730 = vmatpush1.bf16.msra.mxu0 %v690
    %731 = vmatprep.subr.bf16.mxu0 0
    %732 = vmatpush1.bf16.msra.mxu0 %v691
    %733 = vmatprep.subr.bf16.mxu0 0
    %734 = vmatpush1.bf16.msra.mxu0 %v692
    %735 = vmatprep.subr.bf16.mxu0 0
    %736 = vmatpush1.bf16.msra.mxu0 %v693
    %737 = vmatprep.subr.bf16.mxu0 0
    %738 = vmatpush1.bf16.msra.mxu0 %v694
    %739 = vmatprep.subr.bf16.mxu0 0
    %740 = vmatpush1.bf16.msra.mxu0 %v695
    %741 = vmatprep.subr.bf16.mxu0 0
    %742 = vmatpush1.bf16.msra.mxu0 %v696
    %743 = vmatprep.subr.bf16.mxu0 0
    %744 = vmatpush1.bf16.msra.mxu0 %v697
    %745 = vmatprep.subr.bf16.mxu0 0
    %746 = vmatpush1.bf16.msra.mxu0 %v698
    %747 = vmatprep.mubr.bf16.mxu0 %v565
    %748 = vmatmul.mubr.bf16.gmra.mrb[0].mxu0 %v564
    %v749 = vpop.f32.mrb[0].mxu0
    %v750 = vadd.f32 %v617, %v749
    %v751 = vpop.f32.mrb[0].mxu0
    %v752 = vpop.f32.mrb[0].mxu0
    %v753 = vadd.f32 %v617, %v752
    %v754 = vpop.f32.mrb[0].mxu0
    %755 = vmatprep.mubr.bf16.mxu0 %v567
    %756 = vmatmul.mubr.bf16.gmra.mrb[0].mxu0 %v566
    %v757 = vpop.f32.mrb[0].mxu0
    %v758 = vadd.f32 %v617, %v757
    %v759 = vpop.f32.mrb[0].mxu0
    %v760 = vpop.f32.mrb[0].mxu0
    %v761 = vadd.f32 %v617, %v760
    %v762 = vpop.f32.mrb[0].mxu0
    %763 = vmatprep.mubr.bf16.mxu0 %v569
    %764 = vmatmul.mubr.bf16.gmra.mrb[0].mxu0 %v568
    %v765 = vpop.f32.mrb[0].mxu0
    %v766 = vadd.f32 %v617, %v765
    %v767 = vpop.f32.mrb[0].mxu0
    %v768 = vpop.f32.mrb[0].mxu0
    %v769 = vadd.f32 %v617, %v768
    %v770 = vpop.f32.mrb[0].mxu0
    %771 = vmatprep.mubr.bf16.mxu0 %v571
    %772 = vmatmul.mubr.bf16.gmra.mrb[0].mxu0 %v570
    %v773 = vpop.f32.mrb[0].mxu0
    %v774 = vadd.f32 %v617, %v773
    %v775 = vpop.f32.mrb[0].mxu0
    %v776 = vpop.f32.mrb[0].mxu0
    %v777 = vadd.f32 %v617, %v776
    %v778 = vpop.f32.mrb[0].mxu0
    %779 = vmatprep.mubr.bf16.mxu0 %v573
    %780 = vmatmul.mubr.bf16.gmra.mrb[0].mxu0 %v572
    %v781 = vpop.f32.mrb[0].mxu0
    %v782 = vadd.f32 %v617, %v781
    %v783 = vpop.f32.mrb[0].mxu0
    %v784 = vpop.f32.mrb[0].mxu0
    %v785 = vadd.f32 %v617, %v784
    %v786 = vpop.f32.mrb[0].mxu0
    %787 = vmatprep.mubr.bf16.mxu0 %v575
    %788 = vmatmul.mubr.bf16.gmra.mrb[0].mxu0 %v574
    %v789 = vpop.f32.mrb[0].mxu0
    %v790 = vadd.f32 %v617, %v789
    %v791 = vpop.f32.mrb[0].mxu0
    %v792 = vpop.f32.mrb[0].mxu0
    %v793 = vadd.f32 %v617, %v792
    %v794 = vpop.f32.mrb[0].mxu0
    %795 = vmatprep.mubr.bf16.mxu0 %v577
    %796 = vmatmul.mubr.bf16.gmra.mrb[0].mxu0 %v576
    %v797 = vpop.f32.mrb[0].mxu0
    %v798 = vadd.f32 %v617, %v797
    %v799 = vpop.f32.mrb[0].mxu0
    %v800 = vpop.f32.mrb[0].mxu0
    %v801 = vadd.f32 %v617, %v800
    %v802 = vpop.f32.mrb[0].mxu0
    %803 = vmatprep.mubr.bf16.mxu0 %v579
    %804 = vmatmul.mubr.bf16.gmra.mrb[0].mxu0 %v578
    %v805 = vpop.f32.mrb[0].mxu0
    %v806 = vadd.f32 %v617, %v805
    %v807 = vpop.f32.mrb[0].mxu0
    %v808 = vpop.f32.mrb[0].mxu0
    %v809 = vadd.f32 %v617, %v808
    %v810 = vpop.f32.mrb[0].mxu0
    %811 = vdwg.mxu0
    %v812 = vmax.f32 %v750, 0.0
    %v813 = vmax.f32 %v753, 0.0
    %v814 = vmax.f32 %v758, 0.0
    %v815 = vmax.f32 %v761, 0.0
    %v816 = vmax.f32 %v766, 0.0
    %v817 = vmax.f32 %v769, 0.0
    %v818 = vmax.f32 %v774, 0.0
    %v819 = vmax.f32 %v777, 0.0
    %v820 = vmax.f32 %v782, 0.0
    %v821 = vmax.f32 %v785, 0.0
    %v822 = vmax.f32 %v790, 0.0
    %v823 = vmax.f32 %v793, 0.0
    %v824 = vmax.f32 %v798, 0.0
    %v825 = vmax.f32 %v801, 0.0
    %v826 = vmax.f32 %v806, 0.0
    %v827 = vmax.f32 %v809, 0.0
    %v828 = vpack.c.bf16 %v813, %v812
    %v829 = vpack.c.bf16 %v815, %v814
    %v830 = vpack.c.bf16 %v817, %v816
    %v831 = vpack.c.bf16 %v819, %v818
    %v832 = vpack.c.bf16 %v821, %v820
    %v833 = vpack.c.bf16 %v823, %v822
    %v834 = vpack.c.bf16 %v825, %v824
    %v835 = vpack.c.bf16 %v827, %v826
    %v836 = vld [vmem:[#allocation5] sm:$0xf]
    %v837 = vld [vmem:[#allocation5 + $0x4] sm:$0xf]
    %v838 = vld [vmem:[#allocation5 + $0x8] sm:$0xf]
    %v839 = vld [vmem:[#allocation5 + $0xc] sm:$0xf]
    %v840 = vld [vmem:[#allocation5 + $0x10] sm:$0xf]
    %v841 = vld [vmem:[#allocation5 + $0x14] sm:$0xf]
    %v842 = vld [vmem:[#allocation5 + $0x18] sm:$0xf]
    %v843 = vld [vmem:[#allocation5 + $0x1c] sm:$0xf]
    %v844 = vld [vmem:[#allocation5 + $0x20] sm:$0xf]
    %v845 = vld [vmem:[#allocation5 + $0x24] sm:$0xf]
    %v846 = vld [vmem:[#allocation5 + $0x28] sm:$0xf]
    %v847 = vld [vmem:[#allocation5 + $0x2c] sm:$0xf]
    %v848 = vld [vmem:[#allocation5 + $0x30] sm:$0xf]
    %v849 = vld [vmem:[#allocation5 + $0x34] sm:$0xf]
    %v850 = vld [vmem:[#allocation5 + $0x38] sm:$0xf]
    %v851 = vld [vmem:[#allocation5 + $0x3c] sm:$0xf]
    %v852 = vld [vmem:[%s8] sm:$0x1]
    %v854 = vlaneseq
    %v855 = vshrl.u32 %v854, 7
    %v856 = vsub.s32 0, %v855
    %v857 = vrot.slane %v852, %v856
    %v875 = vunpack.c.l.b16 %v836
    %v876 = vunpack.c.l.b16 %v837
    %v877 = vunpack.c.l.b16 %v838
    %v878 = vunpack.c.l.b16 %v839
    %v879 = vunpack.c.l.b16 %v840
    %v880 = vunpack.c.l.b16 %v841
    %v881 = vunpack.c.l.b16 %v842
    %v882 = vunpack.c.l.b16 %v843
    %v883 = vunpack.c.l.b16 %v844
    %v884 = vunpack.c.l.b16 %v845
    %v885 = vunpack.c.l.b16 %v846
    %v886 = vunpack.c.l.b16 %v847
    %v887 = vunpack.c.l.b16 %v848
    %v888 = vunpack.c.l.b16 %v849
    %v889 = vunpack.c.l.b16 %v850
    %v890 = vunpack.c.l.b16 %v851
    %v891 = vpack.c.b16 %v876, %v875
    %v892 = vpack.c.b16 %v878, %v877
    %v893 = vpack.c.b16 %v880, %v879
    %v894 = vpack.c.b16 %v882, %v881
    %v895 = vpack.c.b16 %v884, %v883
    %v896 = vpack.c.b16 %v886, %v885
    %v897 = vpack.c.b16 %v888, %v887
    %v898 = vpack.c.b16 %v890, %v889
    %907 = vmatprep.subr.bf16.mxu0 0
    %908 = vmatpush1.bf16.msra.mxu0 %v891
    %909 = vmatprep.subr.bf16.mxu0 0
    %910 = vmatpush1.bf16.msra.mxu0 %v892
    %911 = vmatprep.subr.bf16.mxu0 0
    %912 = vmatpush1.bf16.msra.mxu0 %v893
    %913 = vmatprep.subr.bf16.mxu0 0
    %914 = vmatpush1.bf16.msra.mxu0 %v894
    %915 = vmatprep.subr.bf16.mxu0 0
    %916 = vmatpush1.bf16.msra.mxu0 %v895
    %917 = vmatprep.subr.bf16.mxu0 0
    %918 = vmatpush1.bf16.msra.mxu0 %v896
    %919 = vmatprep.subr.bf16.mxu0 0
    %920 = vmatpush1.bf16.msra.mxu0 %v897
    %921 = vmatprep.subr.bf16.mxu0 0
    %922 = vmatpush1.bf16.msra.mxu0 %v898
    %923 = vmatprep.subr.bf16.mxu0 0
    %924 = vmatpush1.bf16.msra.mxu0 0
    %925 = vmatprep.subr.bf16.mxu0 0
    %926 = vmatpush1.bf16.msra.mxu0 0
    %927 = vmatprep.subr.bf16.mxu0 0
    %928 = vmatpush1.bf16.msra.mxu0 0
    %929 = vmatprep.subr.bf16.mxu0 0
    %930 = vmatpush1.bf16.msra.mxu0 0
    %931 = vmatprep.subr.bf16.mxu0 0
    %932 = vmatpush1.bf16.msra.mxu0 0
    %933 = vmatprep.subr.bf16.mxu0 0
    %934 = vmatpush1.bf16.msra.mxu0 0
    %935 = vmatprep.subr.bf16.mxu0 0
    %936 = vmatpush1.bf16.msra.mxu0 0
    %937 = vmatprep.subr.bf16.mxu0 0
    %938 = vmatpush1.bf16.msra.mxu0 0
    %939 = vmatprep.mubr.bf16.mxu0 0
    %940 = vmatmul.mubr.bf16.gmra.mrb[0].mxu0 %v828
    %v941 = vpop.f32.mrb[0].mxu0
    %v942 = vadd.f32 %v857, %v941
    %v943 = vpop.f32.mrb[0].mxu0
    %v944 = vpop.f32.mrb[0].mxu0
    %v945 = vadd.f32 %v857, %v944
    %v946 = vpop.f32.mrb[0].mxu0
    %947 = vmatprep.mubr.bf16.mxu0 0
    %948 = vmatmul.mubr.bf16.gmra.mrb[0].mxu0 %v829
    %v949 = vpop.f32.mrb[0].mxu0
    %v950 = vadd.f32 %v857, %v949
    %v951 = vpop.f32.mrb[0].mxu0
    %v952 = vpop.f32.mrb[0].mxu0
    %v953 = vadd.f32 %v857, %v952
    %v954 = vpop.f32.mrb[0].mxu0
    %955 = vmatprep.mubr.bf16.mxu0 0
    %956 = vmatmul.mubr.bf16.gmra.mrb[0].mxu0 %v830
    %v957 = vpop.f32.mrb[0].mxu0
    %v958 = vadd.f32 %v857, %v957
    %v959 = vpop.f32.mrb[0].mxu0
    %v960 = vpop.f32.mrb[0].mxu0
    %v961 = vadd.f32 %v857, %v960
    %v962 = vpop.f32.mrb[0].mxu0
    %963 = vmatprep.mubr.bf16.mxu0 0
    %964 = vmatmul.mubr.bf16.gmra.mrb[0].mxu0 %v831
    %v965 = vpop.f32.mrb[0].mxu0
    %v966 = vadd.f32 %v857, %v965
    %v967 = vpop.f32.mrb[0].mxu0
    %v968 = vpop.f32.mrb[0].mxu0
    %v969 = vadd.f32 %v857, %v968
    %v970 = vpop.f32.mrb[0].mxu0
    %971 = vmatprep.mubr.bf16.mxu0 0
    %972 = vmatmul.mubr.bf16.gmra.mrb[0].mxu0 %v832
    %v973 = vpop.f32.mrb[0].mxu0
    %v974 = vadd.f32 %v857, %v973
    %v975 = vpop.f32.mrb[0].mxu0
    %v976 = vpop.f32.mrb[0].mxu0
    %v977 = vadd.f32 %v857, %v976
    %v978 = vpop.f32.mrb[0].mxu0
    %979 = vmatprep.mubr.bf16.mxu0 0
    %980 = vmatmul.mubr.bf16.gmra.mrb[0].mxu0 %v833
    %v981 = vpop.f32.mrb[0].mxu0
    %v982 = vadd.f32 %v857, %v981
    %v983 = vpop.f32.mrb[0].mxu0
    %v984 = vpop.f32.mrb[0].mxu0
    %v985 = vadd.f32 %v857, %v984
    %v986 = vpop.f32.mrb[0].mxu0
    %987 = vmatprep.mubr.bf16.mxu0 0
    %988 = vmatmul.mubr.bf16.gmra.mrb[0].mxu0 %v834
    %v989 = vpop.f32.mrb[0].mxu0
    %v990 = vadd.f32 %v857, %v989
    %v991 = vpop.f32.mrb[0].mxu0
    %v992 = vpop.f32.mrb[0].mxu0
    %v993 = vadd.f32 %v857, %v992
    %v994 = vpop.f32.mrb[0].mxu0
    %995 = vmatprep.mubr.bf16.mxu0 0
    %996 = vmatmul.mubr.bf16.gmra.mrb[0].mxu0 %v835
    %v997 = vpop.f32.mrb[0].mxu0
    %v998 = vadd.f32 %v857, %v997
    %v999 = vpop.f32.mrb[0].mxu0
    %v1000 = vpop.f32.mrb[0].mxu0
    %v1001 = vadd.f32 %v857, %v1000
    %v1002 = vpop.f32.mrb[0].mxu0
    %1003 = vdwg.mxu0
    %v1004 = vmax.f32 %v942, 0.0
    %v1005 = vmax.f32 %v945, 0.0
    %v1006 = vmax.f32 %v950, 0.0
    %v1007 = vmax.f32 %v953, 0.0
    %v1008 = vmax.f32 %v958, 0.0
    %v1009 = vmax.f32 %v961, 0.0
    %v1010 = vmax.f32 %v966, 0.0
    %v1011 = vmax.f32 %v969, 0.0
    %v1012 = vmax.f32 %v974, 0.0
    %v1013 = vmax.f32 %v977, 0.0
    %v1014 = vmax.f32 %v982, 0.0
    %v1015 = vmax.f32 %v985, 0.0
    %v1016 = vmax.f32 %v990, 0.0
    %v1017 = vmax.f32 %v993, 0.0
    %v1018 = vmax.f32 %v998, 0.0
    %v1019 = vmax.f32 %v1001, 0.0
    %v1020 = vld [vmem:[%s9] sm:$0xf]
    %v1021 = vpack.c.bf16 %v1005, %v1004
    %v1022 = vpack.c.bf16 %v1007, %v1006
    %v1023 = vpack.c.bf16 %v1009, %v1008
    %v1024 = vpack.c.bf16 %v1011, %v1010
    %v1025 = vpack.c.bf16 %v1013, %v1012
    %v1026 = vpack.c.bf16 %v1015, %v1014
    %v1027 = vpack.c.bf16 %v1017, %v1016
    %v1028 = vpack.c.bf16 %v1019, %v1018
    %1029 = vmatprep.subr.bf16.mxu0 0
    %1030 = vmatpush1.bf16.xpose.msra.mxu0 %v1021
    %1031 = vmatprep.subr.bf16.mxu0 0
    %1032 = vmatpush1.bf16.xpose.msra.mxu0 %v1022
    %1033 = vmatprep.subr.bf16.mxu0 0
    %1034 = vmatpush1.bf16.xpose.msra.mxu0 %v1023
    %1035 = vmatprep.subr.bf16.mxu0 0
    %1036 = vmatpush1.bf16.xpose.msra.mxu0 %v1024
    %1037 = vmatprep.subr.bf16.mxu0 0
    %1038 = vmatpush1.bf16.xpose.msra.mxu0 %v1025
    %1039 = vmatprep.subr.bf16.mxu0 0
    %1040 = vmatpush1.bf16.xpose.msra.mxu0 %v1026
    %1041 = vmatprep.subr.bf16.mxu0 0
    %1042 = vmatpush1.bf16.xpose.msra.mxu0 %v1027
    %1043 = vmatprep.subr.bf16.mxu0 0
    %1044 = vmatpush1.bf16.xpose.msra.mxu0 %v1028
    %1045 = vmatprep.subr.bf16.mxu0 0
    %1046 = vmatpush1.bf16.xpose.msra.mxu0 0
    %1047 = vmatprep.subr.bf16.mxu0 0
    %1048 = vmatpush1.bf16.xpose.msra.mxu0 0
    %1049 = vmatprep.subr.bf16.mxu0 0
    %1050 = vmatpush1.bf16.xpose.msra.mxu0 0
    %1051 = vmatprep.subr.bf16.mxu0 0
    %1052 = vmatpush1.bf16.xpose.msra.mxu0 0
    %1053 = vmatprep.subr.bf16.mxu0 0
    %1054 = vmatpush1.bf16.xpose.msra.mxu0 0
    %1055 = vmatprep.subr.bf16.mxu0 0
    %1056 = vmatpush1.bf16.xpose.msra.mxu0 0
    %1057 = vmatprep.subr.bf16.mxu0 0
    %1058 = vmatpush1.bf16.xpose.msra.mxu0 0
    %1059 = vmatprep.subr.bf16.mxu0 0
    %1060 = vmatpush1.bf16.xpose.msra.mxu0 0
    %1061 = vmatprep.mubr.bf16.mxu0 0
    %1062 = vmatmul.mubr.bf16.gmra.mrb[0].mxu0 %v1020
    %v1063 = vpop.f32.mrb[0].mxu0
    %v1064 = vadd.f32 0.0, %v1063
    %v1065 = vpop.f32.mrb[0].mxu0
    %v1066 = vpop.f32.mrb[0].mxu0
    %v1067 = vpop.f32.mrb[0].mxu0
    %1068 = vdwg.mxu0
    %s1069 = sld [smem:[#allocation2]]
    %v1070 = vstv %s1069
    %v1071 = vadd.f32 %v1064, %v1070
    %1072 = vst [vmem:[%s11] sm:$0x1] %v1071
    // Predicated region
    $region54: #{energy_predictor.1} parent=1 // pred_check
      _
    $region55: #{energy_predictor.1} parent=1 // pred_check_branch
      %1074 = sbr.rel (0) target = $region57
    $region56: #{energy_predictor.1} parent=1 // pred_region
      _
    $region57: #{energy_predictor.1} parent=1 // pred_fallthru
      _
    // Predicated region
    $region58: #{energy_predictor.1} parent=1 // pred_check
      _
    $region59: #{energy_predictor.1} parent=1 // pred_check_branch
      %1076 = sbr.rel (0) target = $region61
    $region60: #{energy_predictor.1} parent=1 // pred_region
      _
    $region61: #{energy_predictor.1} parent=1 // pred_fallthru
      _
    %1077 = vsyncpa [#allocation4], 1
    %1078 = vsyncpa [#allocation6], 1

</llo_original>
